<compile_context>
chip_gen: v6e
topology: v6e:2x2x1
jax: 0.10.0
libtpu: 0.0.40
codegen_flags: <defaults>
</compile_context>

<pallas_src>
from functools import partial

import numpy as np
import jax
import jax.numpy as jnp
from jax.experimental import pallas as pl
from jax.experimental.pallas import tpu as pltpu

EPS = 1e-3                       # BatchNorm2d eps used by torchvision BasicConv2d
ACT_DTYPE = jnp.bfloat16         # intermediate activations (accumulation is f32)


def _rup(x, m):
    return (x + m - 1) // m * m


def _tpu_config():
    """Generation-aware tile sizes / VMEM budget."""
    kind = ""
    try:
        kind = jax.devices()[0].device_kind.lower()
    except Exception:
        pass
    is_v5 = "v5" in kind
    is_v7 = "v7" in kind
    if is_v5:                     # 4x128x128 MXU, lowest HBM BW -> big M tiles
        tm, tk, tn = 512, 128, 128
    elif is_v7:                   # 2x256x256 MXU, only 64 MiB VMEM
        tm, tk, tn = 256, 256, 256
    else:                         # v6e / default: 2x256x256 MXU, 128 MiB VMEM
        tm, tk, tn = 512, 256, 256
    pool_tm = 256 if is_v7 else 512
    # 48 MiB scoped VMEM: within v7x's 64 MiB physical, ample headroom elsewhere.
    return dict(tm=tm, tk=tk, tn=tn, pool_tm=pool_tm, vmem=48 * 1024 * 1024)


_CFG = _tpu_config()


def _pick_tile(dim, pref):
    """Tile (multiple of 128) minimizing padded extent; prefer wider on ties."""
    best = 128
    for t in (128, min(pref, _rup(dim, 128))):
        if (_rup(dim, t), -t) < (_rup(dim, best), -best):
            best = t
    return best


# ----------------------------------------------------------------------------
# Pallas kernels
# ----------------------------------------------------------------------------
def _mm_bn_relu_kernel(p_ref, w_ref, s_ref, b_ref, o_ref, acc_ref, *, apply_relu):
    k = pl.program_id(2)

    @pl.when(k == 0)
    def _():
        acc_ref[...] = jnp.zeros_like(acc_ref)

    acc_ref[...] += jnp.dot(p_ref[...], w_ref[...],
                            preferred_element_type=jnp.float32)

    @pl.when(k == pl.num_programs(2) - 1)
    def _():
        y = acc_ref[...] * s_ref[...] + b_ref[...]
        if apply_relu:
            y = jnp.maximum(y, 0.0)
        o_ref[...] = y.astype(o_ref.dtype)


def _mm_plain_kernel(p_ref, w_ref, o_ref, acc_ref):
    k = pl.program_id(2)

    @pl.when(k == 0)
    def _():
        acc_ref[...] = jnp.zeros_like(acc_ref)

    acc_ref[...] += jnp.dot(p_ref[...], w_ref[...],
                            preferred_element_type=jnp.float32)

    @pl.when(k == pl.num_programs(2) - 1)
    def _():
        o_ref[...] = acc_ref[...].astype(o_ref.dtype)


def _maxpool_kernel(x_ref, o_ref):
    o_ref[...] = jnp.max(x_ref[...], axis=0).astype(o_ref.dtype)


def _avgpool_kernel(x_ref, inv_ref, o_ref):
    s = jnp.sum(x_ref[...].astype(jnp.float32), axis=0)
    o_ref[...] = (s * inv_ref[...]).astype(o_ref.dtype)      # (tm,1) broadcast in-kernel


# ----------------------------------------------------------------------------
# Pallas wrappers
# ----------------------------------------------------------------------------
def matmul_fused(p, w, scale=None, bias=None, apply_relu=False,
                 out_dtype=jnp.float32):
    """out = [relu]((p @ w) [* scale + bias]); bf16 MXU inputs, f32 accumulation."""
    M, K = p.shape
    K2, N = w.shape
    assert K == K2
    tm = min(_CFG["tm"], _rup(M, 128))
    tk = _pick_tile(K, _CFG["tk"])
    tn = _pick_tile(N, _CFG["tn"])
    Mp, Kp, Np = _rup(M, tm), _rup(K, tk), _rup(N, tn)
    p_p = jnp.pad(p.astype(jnp.bfloat16), ((0, Mp - M), (0, Kp - K)))
    w_p = jnp.pad(w.astype(jnp.bfloat16), ((0, Kp - K), (0, Np - N)))
    grid = (Mp // tm, Np // tn, Kp // tk)
    cp = pltpu.CompilerParams(
        dimension_semantics=("parallel", "parallel", "arbitrary"),
        vmem_limit_bytes=_CFG["vmem"])
    if scale is None:
        out = pl.pallas_call(
            _mm_plain_kernel,
            out_shape=jax.ShapeDtypeStruct((Mp, Np), out_dtype),
            grid_spec=pltpu.PrefetchScalarGridSpec(
                num_scalar_prefetch=0, grid=grid,
                in_specs=[pl.BlockSpec((tm, tk), lambda i, j, k: (i, k)),
                          pl.BlockSpec((tk, tn), lambda i, j, k: (k, j))],
                out_specs=pl.BlockSpec((tm, tn), lambda i, j, k: (i, j)),
                scratch_shapes=[pltpu.VMEM((tm, tn), jnp.float32)]),
            compiler_params=cp,
        )(p_p, w_p)
    else:
        s_p = jnp.pad(scale.astype(jnp.float32).reshape(1, -1),
                      ((0, 0), (0, Np - N)))
        b_p = jnp.pad(bias.astype(jnp.float32).reshape(1, -1),
                      ((0, 0), (0, Np - N)))
        out = pl.pallas_call(
            partial(_mm_bn_relu_kernel, apply_relu=apply_relu),
            out_shape=jax.ShapeDtypeStruct((Mp, Np), out_dtype),
            grid_spec=pltpu.PrefetchScalarGridSpec(
                num_scalar_prefetch=0, grid=grid,
                in_specs=[pl.BlockSpec((tm, tk), lambda i, j, k: (i, k)),
                          pl.BlockSpec((tk, tn), lambda i, j, k: (k, j)),
                          pl.BlockSpec((1, tn), lambda i, j, k: (0, j)),
                          pl.BlockSpec((1, tn), lambda i, j, k: (0, j))],
                out_specs=pl.BlockSpec((tm, tn), lambda i, j, k: (i, j)),
                scratch_shapes=[pltpu.VMEM((tm, tn), jnp.float32)]),
            compiler_params=cp,
        )(p_p, w_p, s_p, b_p)
    if Mp != M or Np != N:
        out = out[:M, :N]
    return out


def _im2col_nhwc(x, kh, kw, stride, ph, pw):
    n, h, w, c = x.shape
    oh = (h + 2 * ph - kh) // stride + 1
    ow = (w + 2 * pw - kw) // stride + 1
    if kh == 1 and kw == 1 and stride == 1 and ph == 0 and pw == 0:
        return x.reshape(n * h * w, c), oh, ow          # 1x1 conv: pure reshape
    xp = jnp.pad(x, ((0, 0), (ph, ph), (pw, pw), (0, 0)))
    cols = [xp[:, i:i + stride * oh:stride, j:j + stride * ow:stride, :]
            for i in range(kh) for j in range(kw)]
    pat = jnp.concatenate(cols, axis=-1).reshape(n * oh * ow, c * kh * kw)
    return pat, oh, ow


def basic_conv2d(x, p, stride=1, padding=(0, 0)):
    """Conv2d(bias=False) + BatchNorm2d(eps=1e-3, eval) + ReLU, NHWC layout."""
    kh, kw = p["kh"], p["kw"]
    pat, oh, ow = _im2col_nhwc(x, kh, kw, stride, padding[0], padding[1])
    y = matmul_fused(pat, p["w"], p["scale"], p["bias"], apply_relu=True,
                     out_dtype=ACT_DTYPE)
    n = x.shape[0]
    return y.reshape(n, oh, ow, p["w"].shape[1])


def pool(x, kind, k, stride, pad, out_dtype=None):
    """NHWC max / avg (count_include_pad=False) pooling via a Pallas reduction."""
    n, h, w, c = x.shape
    out_dtype = out_dtype or x.dtype
    oh = (h + 2 * pad - k) // stride + 1
    ow = (w + 2 * pad - k) // stride + 1
    pad_val = -1e30 if kind == "max" else 0.0
    xp = jnp.pad(x, ((0, 0), (pad, pad), (pad, pad), (0, 0)),
                 constant_values=pad_val)
    xs = [xp[:, i:i + stride * oh:stride, j:j + stride * ow:stride, :]
          for i in range(k) for j in range(k)]
    xst = jnp.stack(xs, 0).reshape(k * k, n * oh * ow, c)
    W, Pn, C = xst.shape
    tm = min(_CFG["pool_tm"], _rup(Pn, 8))
    Pp = _rup(Pn, tm)
    xst = jnp.pad(xst, ((0, 0), (0, Pp - Pn), (0, 0)))
    cp = pltpu.CompilerParams(dimension_semantics=("parallel",),
                              vmem_limit_bytes=_CFG["vmem"])
    if kind == "max":
        out = pl.pallas_call(
            _maxpool_kernel,
            out_shape=jax.ShapeDtypeStruct((Pp, C), out_dtype),
            grid_spec=pltpu.PrefetchScalarGridSpec(
                num_scalar_prefetch=0, grid=(Pp // tm,),
                in_specs=[pl.BlockSpec((W, tm, C), lambda i: (0, i, 0))],
                out_specs=pl.BlockSpec((tm, C), lambda i: (i, 0))),
            compiler_params=cp,
        )(xst)
    else:
        if pad == 0:
            inv = jnp.full((Pn, 1), 1.0 / (k * k), jnp.float32)
        else:
            # per-position valid-element count (count_include_pad=False)
            ones = jnp.pad(jnp.ones((n, h, w, 1), jnp.float32),
                           ((0, 0), (pad, pad), (pad, pad), (0, 0)))
            cnt = sum(ones[:, i:i + stride * oh:stride,
                           j:j + stride * ow:stride, :]
                      for i in range(k) for j in range(k))
            inv = (1.0 / jnp.maximum(cnt, 1.0)).reshape(n * oh * ow, 1)
        inv = jnp.pad(inv, ((0, Pp - Pn), (0, 0)))
        out = pl.pallas_call(
            _avgpool_kernel,
            out_shape=jax.ShapeDtypeStruct((Pp, C), out_dtype),
            grid_spec=pltpu.PrefetchScalarGridSpec(
                num_scalar_prefetch=0, grid=(Pp // tm,),
                in_specs=[pl.BlockSpec((W, tm, C), lambda i: (0, i, 0)),
                          pl.BlockSpec((tm, 1), lambda i: (i, 0))],
                out_specs=pl.BlockSpec((tm, C), lambda i: (i, 0))),
            compiler_params=cp,
        )(xst, inv)
    return out[:Pn].reshape(n, oh, ow, c)


# ----------------------------------------------------------------------------
# Bilinear resize to 299x299 (F.interpolate, mode='bilinear', align_corners=False)
# ----------------------------------------------------------------------------
def _interp_matrix(out_size, in_size):
    scale = in_size / out_size
    A = np.zeros((out_size, in_size), np.float32)
    for o in range(out_size):
        src = max((o + 0.5) * scale - 0.5, 0.0)
        i0 = min(int(np.floor(src)), in_size - 1)
        i1 = min(i0 + 1, in_size - 1)
        w1 = src - i0
        A[o, i0] += 1.0 - w1
        A[o, i1] += w1
    return A


def bilinear_resize_nchw_to_nhwc(x, out_h, out_w):
    n, c, h, w = x.shape
    Ah = jnp.asarray(_interp_matrix(out_h, h))
    Aw = jnp.asarray(_interp_matrix(out_w, w))
    y = matmul_fused(x.reshape(n * c * h, w), Aw.T)                 # (n*c*h, OW)
    y = y.reshape(n * c, h, out_w).transpose(0, 2, 1).reshape(n * c * out_w, h)
    y = matmul_fused(y, Ah.T)                                       # (n*c*OW, OH)
    return y.reshape(n, c, out_w, out_h).transpose(0, 3, 2, 1)      # NHWC


# ----------------------------------------------------------------------------
# Deterministic synthetic parameters (conv weight + folded eval-mode BN)
# ----------------------------------------------------------------------------
rng = np.random.RandomState(0)


def make_conv(ic, oc, kh, kw):
    fan_in = ic * kh * kw
    w = rng.normal(0.0, np.sqrt(2.0 / fan_in), (oc, ic, kh, kw)).astype(np.float32)
    gamma = rng.uniform(0.8, 1.2, oc).astype(np.float32)
    beta = rng.normal(0.0, 0.05, oc).astype(np.float32)
    rmean = rng.normal(0.0, 0.05, oc).astype(np.float32)
    rvar = rng.uniform(0.8, 1.2, oc).astype(np.float32)
    scale = (gamma / np.sqrt(rvar + EPS)).astype(np.float32)
    bias = (beta - rmean * scale).astype(np.float32)
    # Flatten to (kh*kw*ic, oc), matching im2col column order; bf16 for the MXU.
    wm = np.transpose(w, (2, 3, 1, 0)).reshape(kh * kw * ic, oc)
    return dict(w=jnp.asarray(wm, dtype=jnp.bfloat16), kh=kh, kw=kw,
                scale=jnp.asarray(scale), bias=jnp.asarray(bias))


def p_inception_a(ic, pf):
    return dict(b1=make_conv(ic, 64, 1, 1),
                b5_1=make_conv(ic, 48, 1, 1), b5_2=make_conv(48, 64, 5, 5),
                b3_1=make_conv(ic, 64, 1, 1), b3_2=make_conv(64, 96, 3, 3),
                b3_3=make_conv(96, 96, 3, 3),
                bp=make_conv(ic, pf, 1, 1))


def p_inception_b(ic):
    return dict(b3=make_conv(ic, 384, 3, 3),
                bd_1=make_conv(ic, 64, 1, 1), bd_2=make_conv(64, 96, 3, 3),
                bd_3=make_conv(96, 96, 3, 3))


def p_inception_c(ic, c7):
    return dict(b1=make_conv(ic, 192, 1, 1),
                b7_1=make_conv(ic, c7, 1, 1), b7_2=make_conv(c7, c7, 1, 7),
                b7_3=make_conv(c7, 192, 7, 1),
                bd_1=make_conv(ic, c7, 1, 1), bd_2=make_conv(c7, c7, 7, 1),
                bd_3=make_conv(c7, c7, 1, 7), bd_4=make_conv(c7, c7, 7, 1),
                bd_5=make_conv(c7, 192, 1, 7),
                bp=make_conv(ic, 192, 1, 1))


def p_inception_d(ic):
    return dict(b3_1=make_conv(ic, 192, 1, 1), b3_2=make_conv(192, 320, 3, 3),
                b7_1=make_conv(ic, 192, 1, 1), b7_2=make_conv(192, 192, 1, 7),
                b7_3=make_conv(192, 192, 7, 1), b7_4=make_conv(192, 192, 3, 3))


def p_inception_e(ic):
    return dict(b1=make_conv(ic, 320, 1, 1),
                b3_1=make_conv(ic, 384, 1, 1), b3_2a=make_conv(384, 384, 1, 3),
                b3_2b=make_conv(384, 384, 3, 1),
                bd_1=make_conv(ic, 448, 1, 1), bd_2=make_conv(448, 384, 3, 3),
                bd_3a=make_conv(384, 384, 1, 3), bd_3b=make_conv(384, 384, 3, 1),
                bp=make_conv(ic, 192, 1, 1))


def make_params():
    return dict(
        c1a=make_conv(3, 32, 3, 3),
        c2a=make_conv(32, 32, 3, 3),
        c2b=make_conv(32, 64, 3, 3),
        c3b=make_conv(64, 80, 1, 1),
        c4a=make_conv(80, 192, 3, 3),
        m5b=p_inception_a(192, 32),
        m5c=p_inception_a(256, 64),
        m5d=p_inception_a(288, 64),
        m6a=p_inception_b(288),
        m6b=p_inception_c(768, 128),
        m6c=p_inception_c(768, 160),
        m6d=p_inception_c(768, 160),
        m6e=p_inception_c(768, 192),
        m7a=p_inception_d(768),
        m7b=p_inception_e(1280),
        m7c=p_inception_e(2048),
    )


# ----------------------------------------------------------------------------
# Inception blocks (FID variants: avg pools use count_include_pad=False,
# Mixed_7c branch_pool uses max pool).  Layout is NHWC, concat along channels.
# ----------------------------------------------------------------------------
def f_inception_a(x, p):
    b1 = basic_conv2d(x, p["b1"])
    b5 = basic_conv2d(basic_conv2d(x, p["b5_1"]), p["b5_2"], padding=(2, 2))
    b3 = basic_conv2d(x, p["b3_1"])
    b3 = basic_conv2d(b3, p["b3_2"], padding=(1, 1))
    b3 = basic_conv2d(b3, p["b3_3"], padding=(1, 1))
    bp = basic_conv2d(pool(x, "avg", 3, 1, 1), p["bp"])
    return jnp.concatenate([b1, b5, b3, bp], axis=-1)


def f_inception_b(x, p):
    b3 = basic_conv2d(x, p["b3"], stride=2)
    bd = basic_conv2d(x, p["bd_1"])
    bd = basic_conv2d(bd, p["bd_2"], padding=(1, 1))
    bd = basic_conv2d(bd, p["bd_3"], stride=2)
    bp = pool(x, "max", 3, 2, 0)
    return jnp.concatenate([b3, bd, bp], axis=-1)


def f_inception_c(x, p):
    b1 = basic_conv2d(x, p["b1"])
    b7 = basic_conv2d(x, p["b7_1"])
    b7 = basic_conv2d(b7, p["b7_2"], padding=(0, 3))
    b7 = basic_conv2d(b7, p["b7_3"], padding=(3, 0))
    bd = basic_conv2d(x, p["bd_1"])
    bd = basic_conv2d(bd, p["bd_2"], padding=(3, 0))
    bd = basic_conv2d(bd, p["bd_3"], padding=(0, 3))
    bd = basic_conv2d(bd, p["bd_4"], padding=(3, 0))
    bd = basic_conv2d(bd, p["bd_5"], padding=(0, 3))
    bp = basic_conv2d(pool(x, "avg", 3, 1, 1), p["bp"])
    return jnp.concatenate([b1, b7, bd, bp], axis=-1)


def f_inception_d(x, p):
    b3 = basic_conv2d(basic_conv2d(x, p["b3_1"]), p["b3_2"], stride=2)
    b7 = basic_conv2d(x, p["b7_1"])
    b7 = basic_conv2d(b7, p["b7_2"], padding=(0, 3))
    b7 = basic_conv2d(b7, p["b7_3"], padding=(3, 0))
    b7 = basic_conv2d(b7, p["b7_4"], stride=2)
    bp = pool(x, "max", 3, 2, 0)
    return jnp.concatenate([b3, b7, bp], axis=-1)


def f_inception_e(x, p, branch_pool_kind):
    b1 = basic_conv2d(x, p["b1"])
    b3 = basic_conv2d(x, p["b3_1"])
    b3 = jnp.concatenate([basic_conv2d(b3, p["b3_2a"], padding=(0, 1)),
                          basic_conv2d(b3, p["b3_2b"], padding=(1, 0))], axis=-1)
    bd = basic_conv2d(x, p["bd_1"])
    bd = basic_conv2d(bd, p["bd_2"], padding=(1, 1))
    bd = jnp.concatenate([basic_conv2d(bd, p["bd_3a"], padding=(0, 1)),
                          basic_conv2d(bd, p["bd_3b"], padding=(1, 0))], axis=-1)
    bp = basic_conv2d(pool(x, branch_pool_kind, 3, 1, 1), p["bp"])
    return jnp.concatenate([b1, b3, bd, bp], axis=-1)


def inceptionv3_forward(inp, P):
    # pytorch_fid.InceptionV3 forward (resize_input=True, normalize_input=False,
    # output_blocks=[3]) followed by the wrapper's .squeeze().  Input is NCHW.
    x = bilinear_resize_nchw_to_nhwc(inp, 299, 299)
    # block 0
    x = basic_conv2d(x, P["c1a"], stride=2)
    x = basic_conv2d(x, P["c2a"])
    x = basic_conv2d(x, P["c2b"], padding=(1, 1))
    x = pool(x, "max", 3, 2, 0)
    # block 1
    x = basic_conv2d(x, P["c3b"])
    x = basic_conv2d(x, P["c4a"])
    x = pool(x, "max", 3, 2, 0)
    # block 2
    x = f_inception_a(x, P["m5b"])
    x = f_inception_a(x, P["m5c"])
    x = f_inception_a(x, P["m5d"])
    x = f_inception_b(x, P["m6a"])
    x = f_inception_c(x, P["m6b"])
    x = f_inception_c(x, P["m6c"])
    x = f_inception_c(x, P["m6d"])
    x = f_inception_c(x, P["m6e"])
    # block 3
    x = f_inception_d(x, P["m7a"])
    x = f_inception_e(x, P["m7b"], "avg")   # FIDInceptionE_1
    x = f_inception_e(x, P["m7c"], "max")   # FIDInceptionE_2
    # AdaptiveAvgPool2d(1) -> (N,1,1,2048) in NHWC, emitted in f32
    x = pool(x, "avg", x.shape[1], x.shape[1], 0, out_dtype=jnp.float32)
    return jnp.squeeze(x)                   # wrapper squeeze -> (N, 2048)


if __name__ == "__main__":
    params = make_params()
    key = jax.random.PRNGKey(0)
    inp = jax.random.normal(key, (2, 3, 16, 16), dtype=jnp.float32)  # NCHW
    out = inceptionv3_forward(inp, params)
    out = jax.block_until_ready(out)
    assert out.shape == (2, 2048), out.shape
    assert bool(jnp.all(jnp.isfinite(out)))
    print("KERNEL_OK")
</pallas_src>

<mosaic_0001>
module attributes {stable_mosaic.version = 11 : i64} {
  func.func @_mm_plain_kernel(%arg0: i32, %arg1: i32, %arg2: i32, %arg3: memref<128x128xbf16, #tpu.memory_space<vmem>>, %arg4: memref<128x128xbf16, #tpu.memory_space<vmem>>, %arg5: memref<128x128xf32, #tpu.memory_space<vmem>>, %arg6: memref<128x128xf32, #tpu.memory_space<vmem>>) attributes {dimension_semantics = [#tpu.dimension_semantics<parallel>, #tpu.dimension_semantics<parallel>, #tpu.dimension_semantics<arbitrary>], iteration_bounds = array<i64: 1, 3, 1>, scalar_prefetch = 0 : i64, scratch_operands = 1 : i64, tpu.core_type = #tpu.core_type<tc>, window_params = [{transform_indices = @transform_0, window_bounds = array<i64: 128, 128>}, {transform_indices = @transform_1, window_bounds = array<i64: 128, 128>}, {transform_indices = @transform_2, window_bounds = array<i64: 128, 128>}]} {
    %c0_i32 = arith.constant 0 : i32
    %0 = arith.cmpi eq, %arg2, %c0_i32 : i32
    %1 = arith.extui %0 : i1 to i32
    %c0_i32_0 = arith.constant 0 : i32
    %2 = arith.cmpi ne, %1, %c0_i32_0 : i32
    scf.if %2 {
      %cst_10 = arith.constant 0.000000e+00 : f32
      %12 = vector.broadcast %cst_10 : f32 to vector<128x128xf32>
      %c0_11 = arith.constant 0 : index
      %c0_12 = arith.constant 0 : index
      %13 = vector.load %arg6[%c0_11, %c0_12] : memref<128x128xf32, #tpu.memory_space<vmem>>, vector<128x128xf32>
      tpu.vector_store %arg6[%c0_11, %c0_12], %12 {strides = array<i32>} : memref<128x128xf32, #tpu.memory_space<vmem>>, vector<128x128xf32>,
    } else {
    }
    %c0 = arith.constant 0 : index
    %c0_1 = arith.constant 0 : index
    %3 = vector.load %arg6[%c0, %c0_1] : memref<128x128xf32, #tpu.memory_space<vmem>>, vector<128x128xf32>
    %c0_2 = arith.constant 0 : index
    %c0_3 = arith.constant 0 : index
    %4 = vector.load %arg3[%c0_2, %c0_3] : memref<128x128xbf16, #tpu.memory_space<vmem>>, vector<128x128xbf16>
    %c0_4 = arith.constant 0 : index
    %c0_5 = arith.constant 0 : index
    %5 = vector.load %arg4[%c0_4, %c0_5] : memref<128x128xbf16, #tpu.memory_space<vmem>>, vector<128x128xbf16>
    %cst = arith.constant dense<0.000000e+00> : vector<128x128xf32>
    %6 = tpu.matmul %4, %5, %cst {dimension_numbers = #tpu.dot_dimension_numbers<[1], [0], [0], [1], [0, 0, 1, 1], [], []>} : vector<128x128xbf16>, vector<128x128xbf16>, vector<128x128xf32> -> vector<128x128xf32>
    %7 = arith.addf %3, %6 : vector<128x128xf32>
    %c0_6 = arith.constant 0 : index
    %c0_7 = arith.constant 0 : index
    %8 = vector.load %arg6[%c0_6, %c0_7] : memref<128x128xf32, #tpu.memory_space<vmem>>, vector<128x128xf32>
    tpu.vector_store %arg6[%c0_6, %c0_7], %7 {strides = array<i32>} : memref<128x128xf32, #tpu.memory_space<vmem>>, vector<128x128xf32>,
    %c0_i32_8 = arith.constant 0 : i32
    %9 = arith.cmpi eq, %arg2, %c0_i32_8 : i32
    %10 = arith.extui %9 : i1 to i32
    %c0_i32_9 = arith.constant 0 : i32
    %11 = arith.cmpi ne, %10, %c0_i32_9 : i32
    scf.if %11 {
      %c0_10 = arith.constant 0 : index
      %c0_11 = arith.constant 0 : index
      %12 = vector.load %arg6[%c0_10, %c0_11] : memref<128x128xf32, #tpu.memory_space<vmem>>, vector<128x128xf32>
      %c0_12 = arith.constant 0 : index
      %c0_13 = arith.constant 0 : index
      %13 = vector.load %arg5[%c0_12, %c0_13] : memref<128x128xf32, #tpu.memory_space<vmem>>, vector<128x128xf32>
      tpu.vector_store %arg5[%c0_12, %c0_13], %12 {strides = array<i32>} : memref<128x128xf32, #tpu.memory_space<vmem>>, vector<128x128xf32>,
    } else {
    }
    return
  }
  func.func @transform_0(%arg0: i32, %arg1: i32, %arg2: i32) -> (i32, i32) {
    %c0_i32 = arith.constant 0 : i32
    return %arg0, %arg2 : i32, i32
  }
  func.func @transform_1(%arg0: i32, %arg1: i32, %arg2: i32) -> (i32, i32) {
    %c0_i32 = arith.constant 0 : i32
    return %arg2, %arg1 : i32, i32
  }
  func.func @transform_2(%arg0: i32, %arg1: i32, %arg2: i32) -> (i32, i32) {
    %c0_i32 = arith.constant 0 : i32
    return %arg0, %arg1 : i32, i32
  }
}

</mosaic_0001>

<llo_original>
// kernel: tpu_custom_call.1
$region0: #{tpu_custom_call.1}
  #allocation0 [shape = 'u32[]', space=smem, size = 0x4, offset = 0x4, fixed_abs, tag = 'smem constant byte address 0x4 - core index']
  #allocation1 [shape = 'u32[144,128]{1,0:T(1,128)}', space=vmem, size = 0x12000, scoped, tag = 'internal scratch']
  #allocation2 [shape = 'f32[128,128]{1,0:T(8,128)}', space=vmem, size = 0x10000, scoped, tag = 'scratch operand']
  %s0 = inlined_call_operand.hbm [shape: bf16[128,128], index: 0, kind: input, shape index: {}]
  %s1 = inlined_call_operand.hbm [shape: bf16[128,384], index: 1, kind: input, shape index: {}]
  %s2 = inlined_call_operand.hbm [shape: f32[128,384], index: 2, kind: output, shape index: {}]
  %s3 = sld [smem:[#allocation0]]
  $region57: #{tpu_custom_call.1} parent=0
    _
  %s5 = ssub.s32 1, %s3
  %s6 = scalar_select 0, %s5, %s3
  $region1: #{tpu_custom_call.1} parent=0
    #allocation3 [shape = 'u8[32768]{0}', space=vmem, size = 0x8000, scoped, tag = 'input window, operand 0, single buffered']
    #allocation4 [shape = 's32[2]{0}', space=sflag, size = 0x8, scoped, tag = 'scoped memory for tpu_custom_call.1']
    #allocation5 [shape = 's32[2]{0}', space=sflag, size = 0x8, scoped, tag = 'scoped memory for tpu_custom_call.1']
    #allocation6 [shape = 'u8[65536]{0}', space=vmem, size = 0x10000, scoped, tag = 'input window, operand 1']
    #allocation7 [shape = 's32[2]{0}', space=sflag, size = 0x8, scoped, tag = 'scoped memory for tpu_custom_call.1']
    #allocation8 [shape = 'u8[131072]{0}', space=vmem, size = 0x20000, scoped, tag = 'output window, operand 0']
    %7 = vsyncpa [#allocation4], 0
    %8 = vsyncpa [#allocation7], 0
    %s9 = scalar_lea.sflag [#allocation7], 1
    %10 = vsyncpa %s9, 0
    %11 = vsyncpa [#allocation5], 0
    %s12 = scalar_lea.sflag [#allocation5], 1
    %13 = vsyncpa %s12, 0
    loop: start=0, step=1, limit=5
    $region2: #{tpu_custom_call.1} parent=1 // loop_pre_header
      _
    $region3: #{tpu_custom_call.1} parent=1 // loop_header
      %s15 = sphi 0, %s19
      %p16 = scmp.ge.s32.totalorder %s15, 5
      %s22 = sphi 0, %s41
      %s23 = sphi 0, %s37
      %s24 = sphi 0, %s33
      %s25 = sphi 0, %s22
      %s26 = sphi 0, %s23
      %s27 = sphi 0, %s24
      %s28 = sphi 0, %s25
      %s29 = sphi 0, %s26
      %s30 = sphi 0, %s27
      %s46 = sphi 0, %s48
      %s49 = sphi 0, %s46
      %s50 = sphi 0, %s49
      %s66 = sphi 0, %s50
      %s74 = sphi 0, %s76
      %s77 = sphi 0, %s74
      %s78 = sphi 0, %s77
      %s94 = sphi 0, %s78
      %s102 = sphi 0, %s104
      %s105 = sphi 0, %s102
      %s106 = sphi 0, %s105
      %s122 = sphi 0, %s106
    $region4: #{tpu_custom_call.1} parent=1 // loop_header_branch
      %18 = sbr.rel (%p16) target = $region8
    $region5: #{tpu_custom_call.1} parent=1 // loop_body
      %s20 = ssub.s32 %s15, 1
      %s21 = ssub.s32 %s15, 2
      %s31 = sadd.s32 1, %s24
      %p32 = scmp.ge.s32.totalorder %s31, 1
      %s33 = scalar_select %p32, 0, %s31
      %s34 = sadd.s32 1, %s23
      %s35 = scalar_select %p32, %s34, %s23
      %p36 = scmp.ge.s32.totalorder %s35, 3
      %s37 = scalar_select %p36, 0, %s35
      %s38 = sadd.s32 1, %s22
      %s39 = scalar_select %p36, %s38, %s22
      %p40 = scmp.ge.s32.totalorder %s39, 1
      %s41 = scalar_select %p40, 0, %s39
      %s42 = ssub.s32 %s22, %s41
      %s43 = ssub.s32 %s24, %s33
      %s44 = sor.u32 %s42, %s43
      %p45 = scmp.eq.s32.totalorder %s44, 0
      %s47 = sadd.s32 %s46, 1
      %s48 = scalar_select %p45, %s46, %s47
      %p51 = pneg %p45
      %p52 = scmp.eq.s32.totalorder %s15, 2
      %p53 = por %p51, %p52
      %p54 = scmp.ne.s32.totalorder %s46, %s49
      %p55 = scmp.eq.s32.totalorder %s15, 0
      %p56 = por %p54, %p55
      %p57 = scmp.ne.s32.totalorder %s46, %s49
      %p58 = scmp.eq.s32.totalorder %s20, 2
      %p59 = por %p57, %p58
      %p60 = scmp.ne.s32.totalorder %s49, %s50
      %p61 = scmp.eq.s32.totalorder %s20, 0
      %p62 = por %p60, %p61
      %p63 = scmp.ne.s32.totalorder %s49, %s50
      %p64 = scmp.eq.s32.totalorder %s21, 2
      %p65 = por %p63, %p64
      %p67 = scmp.ne.s32.totalorder %s50, %s66
      %p68 = scmp.eq.s32.totalorder %s21, 0
      %p69 = por %p67, %p68
      %s70 = ssub.s32 %s24, %s33
      %s71 = ssub.s32 %s23, %s37
      %s72 = sor.u32 %s70, %s71
      %p73 = scmp.eq.s32.totalorder %s72, 0
      %s75 = sadd.s32 %s74, 1
      %s76 = scalar_select %p73, %s74, %s75
      %p79 = pneg %p73
      %p80 = scmp.eq.s32.totalorder %s15, 2
      %p81 = por %p79, %p80
      %p82 = scmp.ne.s32.totalorder %s74, %s77
      %p83 = scmp.eq.s32.totalorder %s15, 0
      %p84 = por %p82, %p83
      %p85 = scmp.ne.s32.totalorder %s74, %s77
      %p86 = scmp.eq.s32.totalorder %s20, 2
      %p87 = por %p85, %p86
      %p88 = scmp.ne.s32.totalorder %s77, %s78
      %p89 = scmp.eq.s32.totalorder %s20, 0
      %p90 = por %p88, %p89
      %p91 = scmp.ne.s32.totalorder %s77, %s78
      %p92 = scmp.eq.s32.totalorder %s21, 2
      %p93 = por %p91, %p92
      %p95 = scmp.ne.s32.totalorder %s78, %s94
      %p96 = scmp.eq.s32.totalorder %s21, 0
      %p97 = por %p95, %p96
      %s98 = ssub.s32 %s22, %s41
      %s99 = ssub.s32 %s23, %s37
      %s100 = sor.u32 %s98, %s99
      %p101 = scmp.eq.s32.totalorder %s100, 0
      %s103 = sadd.s32 %s102, 1
      %s104 = scalar_select %p101, %s102, %s103
      %p107 = pneg %p101
      %p108 = scmp.eq.s32.totalorder %s15, 2
      %p109 = por %p107, %p108
      %p110 = scmp.ne.s32.totalorder %s102, %s105
      %p111 = scmp.eq.s32.totalorder %s15, 0
      %p112 = por %p110, %p111
      %p113 = scmp.ne.s32.totalorder %s102, %s105
      %p114 = scmp.eq.s32.totalorder %s20, 2
      %p115 = por %p113, %p114
      %p116 = scmp.ne.s32.totalorder %s105, %s106
      %p117 = scmp.eq.s32.totalorder %s20, 0
      %p118 = por %p116, %p117
      %p119 = scmp.ne.s32.totalorder %s105, %s106
      %p120 = scmp.eq.s32.totalorder %s21, 2
      %p121 = por %p119, %p120
      %p123 = scmp.ne.s32.totalorder %s106, %s122
      %p124 = scmp.eq.s32.totalorder %s21, 0
      %p125 = por %p123, %p124
      %p126 = scmp.le.s32.totalorder 1, %s15
      %p127 = scmp.lt.s32.totalorder %s15, 4
      %p128 = pnand %p126, %p127
      %p129 = pneg %p128
      // Predicated region
      $region9: #{tpu_custom_call.1} parent=5 // pred_check
        _
      $region10: #{tpu_custom_call.1} parent=5 // pred_check_branch
        %131 = sbr.rel (%p128) target = $region12
      $region11: #{tpu_custom_call.1} parent=5 // pred_region
        %s132 = ssub.s32 %s15, 1
        // Predicated region
        $region13: #{tpu_custom_call.1} parent=11 // pred_check
          %p133 = pneg %p62
        $region14: #{tpu_custom_call.1} parent=11 // pred_check_branch
          %135 = sbr.rel (%p133) target = $region16
        $region15: #{tpu_custom_call.1} parent=11 // pred_region
          %s136 = smul.u32 16, %s25
          %s138 = ssub.s32 1024, 1024
          %139 = vsyncadd [#allocation4], %s138
          %s140 = sadd.s32 %s27, %s136
          %s141 = smul.addr %s140, 64
          %s142 = scalar_lea.hbm %s0, %s141
          %s143 = sshll.u32 [#allocation3], 4
          %s144 = int_to_ptr.vmem [resolvable:$true] %s143
          %149 = dma.hbm_to_vmem [thread:$0]  %s142, 1024, %s144, [#allocation4], 64, 64, 4
        $region16: #{tpu_custom_call.1} parent=11 // pred_fallthru
          _
      $region12: #{tpu_custom_call.1} parent=5 // pred_fallthru
        _
      %p150 = scmp.lt.s32.totalorder %s15, 3
      // Predicated region
      $region17: #{tpu_custom_call.1} parent=5 // pred_check
        %p151 = pneg %p150
      $region18: #{tpu_custom_call.1} parent=5 // pred_check_branch
        %153 = sbr.rel (%p151) target = $region20
      $region19: #{tpu_custom_call.1} parent=5 // pred_region
        // Predicated region
        $region21: #{tpu_custom_call.1} parent=19 // pred_check
          %p154 = pneg %p84
        $region22: #{tpu_custom_call.1} parent=19 // pred_check_branch
          %156 = sbr.rel (%p154) target = $region24
        $region23: #{tpu_custom_call.1} parent=19 // pred_region
          %s157 = sand.u32 %s74, 1
          %s158 = scalar_lea.sflag [#allocation7], %s157
          %s159 = sand.u32 %s74, 1
          %s160 = smul.addr %s159, 64
          %s161 = scalar_lea.vmem [#allocation6], %s160
          %s162 = smul.u32 16, %s24
          %s164 = ssub.s32 1024, 1024
          %165 = vsyncadd %s158, %s164
          %s166 = smul.addr %s162, 3
          %s167 = sadd.s32 %s23, %s166
          %s168 = smul.addr %s167, 64
          %s169 = scalar_lea.hbm %s1, %s168
          %s170 = sshll.u32 %s161, 4
          %s171 = int_to_ptr.vmem [resolvable:$true] %s170
          %176 = dma.hbm_to_vmem [thread:$0]  %s169, 1024, %s171, %s158, 192, 64, 4
        $region24: #{tpu_custom_call.1} parent=19 // pred_fallthru
          _
      $region20: #{tpu_custom_call.1} parent=5 // pred_fallthru
        _
      %p177 = scmp.le.s32.totalorder 1, %s15
      %p178 = scmp.lt.s32.totalorder %s15, 4
      %p179 = pnand %p177, %p178
      %p180 = pneg %p179
      // Predicated region
      $region25: #{tpu_custom_call.1} parent=5 // pred_check
        _
      $region26: #{tpu_custom_call.1} parent=5 // pred_check_branch
        %182 = sbr.rel (%p179) target = $region28
      $region27: #{tpu_custom_call.1} parent=5 // pred_region
        %s183 = ssub.s32 %s15, 1
        // Predicated region
        $region29: #{tpu_custom_call.1} parent=27 // pred_check
          %p184 = pneg %p62
        $region30: #{tpu_custom_call.1} parent=27 // pred_check_branch
          %186 = sbr.rel (%p184) target = $region32
        $region31: #{tpu_custom_call.1} parent=27 // pred_region
          %187 = dma.done [#allocation4], 1024
        $region32: #{tpu_custom_call.1} parent=27 // pred_fallthru
          _
        %s188 = sand.u32 %s77, 1
        %s189 = scalar_lea.sflag [#allocation7], %s188
        %s190 = sand.u32 %s77, 1
        %s191 = smul.addr %s190, 64
        %s192 = scalar_lea.vmem [#allocation6], %s191
        // Predicated region
        $region33: #{tpu_custom_call.1} parent=27 // pred_check
          %p193 = pneg %p90
        $region34: #{tpu_custom_call.1} parent=27 // pred_check_branch
          %195 = sbr.rel (%p193) target = $region36
        $region35: #{tpu_custom_call.1} parent=27 // pred_region
          %196 = dma.done %s189, 1024
        $region36: #{tpu_custom_call.1} parent=27 // pred_fallthru
          _
        %p197 = pneg %p62
        %p198 = pneg %p59
        %s199 = sand.u32 %s77, 1
        %s200 = scalar_lea.sflag [#allocation7], %s199
        %s201 = sand.u32 %s77, 1
        %s202 = smul.addr %s201, 64
        %s203 = scalar_lea.vmem [#allocation6], %s202
        %p204 = pneg %p90
        %p205 = pneg %p87
        %p206 = pneg %p118
        %p207 = pneg %p115
        %s208 = sand.u32 %s105, 1
        %s209 = scalar_lea.sflag [#allocation5], %s208
        %s210 = sand.u32 %s105, 1
        %s211 = smul.addr %s210, 128
        %s212 = scalar_lea.vmem [#allocation8], %s211
        %s213 = smul.u32 16, %s25
        %s214 = smul.u32 16, %s27
        %s215 = smul.u32 16, %s25
        %p217 = scmp.eq.s32.totalorder %s27, 0
        // Predicated region
        $region37: #{tpu_custom_call.1} parent=27 // pred_check
          %p218 = pneg %p217
        $region38: #{tpu_custom_call.1} parent=27 // pred_check_branch
          %220 = sbr.rel (%p218) target = $region40
        $region39: #{tpu_custom_call.1} parent=27 // pred_region
          %221 = vst [vmem:[#allocation2] sm:$0xff] 0.0
          %222 = vst [vmem:[#allocation2 + $0x8] sm:$0xff] 0.0
          %223 = vst [vmem:[#allocation2 + $0x10] sm:$0xff] 0.0
          %224 = vst [vmem:[#allocation2 + $0x18] sm:$0xff] 0.0
          %225 = vst [vmem:[#allocation2 + $0x20] sm:$0xff] 0.0
          %226 = vst [vmem:[#allocation2 + $0x28] sm:$0xff] 0.0
          %227 = vst [vmem:[#allocation2 + $0x30] sm:$0xff] 0.0
          %228 = vst [vmem:[#allocation2 + $0x38] sm:$0xff] 0.0
          %229 = vst [vmem:[#allocation2 + $0x40] sm:$0xff] 0.0
          %230 = vst [vmem:[#allocation2 + $0x48] sm:$0xff] 0.0
          %231 = vst [vmem:[#allocation2 + $0x50] sm:$0xff] 0.0
          %232 = vst [vmem:[#allocation2 + $0x58] sm:$0xff] 0.0
          %233 = vst [vmem:[#allocation2 + $0x60] sm:$0xff] 0.0
          %234 = vst [vmem:[#allocation2 + $0x68] sm:$0xff] 0.0
          %235 = vst [vmem:[#allocation2 + $0x70] sm:$0xff] 0.0
          %236 = vst [vmem:[#allocation2 + $0x78] sm:$0xff] 0.0
        $region40: #{tpu_custom_call.1} parent=27 // pred_fallthru
          _
        %v237 = vld [vmem:[#allocation2] sm:$0xff]
        %v238 = vld [vmem:[#allocation2 + $0x8] sm:$0xff]
        %v239 = vld [vmem:[#allocation2 + $0x10] sm:$0xff]
        %v240 = vld [vmem:[#allocation2 + $0x18] sm:$0xff]
        %v241 = vld [vmem:[#allocation2 + $0x20] sm:$0xff]
        %v242 = vld [vmem:[#allocation2 + $0x28] sm:$0xff]
        %v243 = vld [vmem:[#allocation2 + $0x30] sm:$0xff]
        %v244 = vld [vmem:[#allocation2 + $0x38] sm:$0xff]
        %v245 = vld [vmem:[#allocation2 + $0x40] sm:$0xff]
        %v246 = vld [vmem:[#allocation2 + $0x48] sm:$0xff]
        %v247 = vld [vmem:[#allocation2 + $0x50] sm:$0xff]
        %v248 = vld [vmem:[#allocation2 + $0x58] sm:$0xff]
        %v249 = vld [vmem:[#allocation2 + $0x60] sm:$0xff]
        %v250 = vld [vmem:[#allocation2 + $0x68] sm:$0xff]
        %v251 = vld [vmem:[#allocation2 + $0x70] sm:$0xff]
        %v252 = vld [vmem:[#allocation2 + $0x78] sm:$0xff]
        %v253 = vld [vmem:[#allocation3] sm:$0xf]
        %v254 = vld [vmem:[#allocation3 + $0x4] sm:$0xf]
        %v255 = vld [vmem:[#allocation3 + $0x8] sm:$0xf]
        %v256 = vld [vmem:[#allocation3 + $0xc] sm:$0xf]
        %v257 = vld [vmem:[#allocation3 + $0x10] sm:$0xf]
        %v258 = vld [vmem:[#allocation3 + $0x14] sm:$0xf]
        %v259 = vld [vmem:[#allocation3 + $0x18] sm:$0xf]
        %v260 = vld [vmem:[#allocation3 + $0x1c] sm:$0xf]
        %v261 = vld [vmem:[#allocation3 + $0x20] sm:$0xf]
        %v262 = vld [vmem:[#allocation3 + $0x24] sm:$0xf]
        %v263 = vld [vmem:[#allocation3 + $0x28] sm:$0xf]
        %v264 = vld [vmem:[#allocation3 + $0x2c] sm:$0xf]
        %v265 = vld [vmem:[#allocation3 + $0x30] sm:$0xf]
        %v266 = vld [vmem:[#allocation3 + $0x34] sm:$0xf]
        %v267 = vld [vmem:[#allocation3 + $0x38] sm:$0xf]
        %v268 = vld [vmem:[#allocation3 + $0x3c] sm:$0xf]
        %v269 = vld [vmem:[%s192] sm:$0xf]
        %v270 = vld [vmem:[%s192 + $0x4] sm:$0xf]
        %v271 = vld [vmem:[%s192 + $0x8] sm:$0xf]
        %v272 = vld [vmem:[%s192 + $0xc] sm:$0xf]
        %v273 = vld [vmem:[%s192 + $0x10] sm:$0xf]
        %v274 = vld [vmem:[%s192 + $0x14] sm:$0xf]
        %v275 = vld [vmem:[%s192 + $0x18] sm:$0xf]
        %v276 = vld [vmem:[%s192 + $0x1c] sm:$0xf]
        %v277 = vld [vmem:[%s192 + $0x20] sm:$0xf]
        %v278 = vld [vmem:[%s192 + $0x24] sm:$0xf]
        %v279 = vld [vmem:[%s192 + $0x28] sm:$0xf]
        %v280 = vld [vmem:[%s192 + $0x2c] sm:$0xf]
        %v281 = vld [vmem:[%s192 + $0x30] sm:$0xf]
        %v282 = vld [vmem:[%s192 + $0x34] sm:$0xf]
        %v283 = vld [vmem:[%s192 + $0x38] sm:$0xf]
        %v284 = vld [vmem:[%s192 + $0x3c] sm:$0xf]
        %v301 = vunpack.c.l.b16 %v253
        %v302 = vunpack.c.l.b16 %v254
        %v303 = vunpack.c.l.b16 %v255
        %v304 = vunpack.c.l.b16 %v256
        %v305 = vunpack.c.l.b16 %v257
        %v306 = vunpack.c.l.b16 %v258
        %v307 = vunpack.c.l.b16 %v259
        %v308 = vunpack.c.l.b16 %v260
        %v309 = vunpack.c.l.b16 %v261
        %v310 = vunpack.c.l.b16 %v262
        %v311 = vunpack.c.l.b16 %v263
        %v312 = vunpack.c.l.b16 %v264
        %v313 = vunpack.c.l.b16 %v265
        %v314 = vunpack.c.l.b16 %v266
        %v315 = vunpack.c.l.b16 %v267
        %v316 = vunpack.c.l.b16 %v268
        %v317 = vpack.c.b16 %v302, %v301
        %v318 = vpack.c.b16 %v304, %v303
        %v319 = vpack.c.b16 %v306, %v305
        %v320 = vpack.c.b16 %v308, %v307
        %v321 = vpack.c.b16 %v310, %v309
        %v322 = vpack.c.b16 %v312, %v311
        %v323 = vpack.c.b16 %v314, %v313
        %v324 = vpack.c.b16 %v316, %v315
        %v349 = vunpack.c.l.b16 %v269
        %v350 = vunpack.c.l.b16 %v270
        %v351 = vunpack.c.l.b16 %v271
        %v352 = vunpack.c.l.b16 %v272
        %v353 = vunpack.c.l.b16 %v273
        %v354 = vunpack.c.l.b16 %v274
        %v355 = vunpack.c.l.b16 %v275
        %v356 = vunpack.c.l.b16 %v276
        %v357 = vunpack.c.l.b16 %v277
        %v358 = vunpack.c.l.b16 %v278
        %v359 = vunpack.c.l.b16 %v279
        %v360 = vunpack.c.l.b16 %v280
        %v361 = vunpack.c.l.b16 %v281
        %v362 = vunpack.c.l.b16 %v282
        %v363 = vunpack.c.l.b16 %v283
        %v364 = vunpack.c.l.b16 %v284
        %v365 = vpack.c.b16 %v350, %v349
        %v366 = vpack.c.b16 %v352, %v351
        %v367 = vpack.c.b16 %v354, %v353
        %v368 = vpack.c.b16 %v356, %v355
        %v369 = vpack.c.b16 %v358, %v357
        %v370 = vpack.c.b16 %v360, %v359
        %v371 = vpack.c.b16 %v362, %v361
        %v372 = vpack.c.b16 %v364, %v363
        %381 = vmatprep.subr.bf16.mxu0 0
        %382 = vmatpush1.bf16.msra.mxu0 %v372
        %383 = vmatprep.subr.bf16.mxu0 0
        %384 = vmatpush1.bf16.msra.mxu0 %v371
        %385 = vmatprep.subr.bf16.mxu0 0
        %386 = vmatpush1.bf16.msra.mxu0 %v370
        %387 = vmatprep.subr.bf16.mxu0 0
        %388 = vmatpush1.bf16.msra.mxu0 %v369
        %389 = vmatprep.subr.bf16.mxu0 0
        %390 = vmatpush1.bf16.msra.mxu0 %v368
        %391 = vmatprep.subr.bf16.mxu0 0
        %392 = vmatpush1.bf16.msra.mxu0 %v367
        %393 = vmatprep.subr.bf16.mxu0 0
        %394 = vmatpush1.bf16.msra.mxu0 %v366
        %395 = vmatprep.subr.bf16.mxu0 0
        %396 = vmatpush1.bf16.msra.mxu0 %v365
        %397 = vmatprep.subr.bf16.mxu0 0
        %398 = vmatpush2.bf16.msra.mxu0 0
        %399 = vmatprep.subr.bf16.mxu0 0
        %400 = vmatpush2.bf16.msra.mxu0 0
        %401 = vmatprep.subr.bf16.mxu0 0
        %402 = vmatpush2.bf16.msra.mxu0 0
        %403 = vmatprep.subr.bf16.mxu0 0
        %404 = vmatpush2.bf16.msra.mxu0 0
        %405 = vmatprep.subr.bf16.mxu0 0
        %406 = vmatpush2.bf16.msra.mxu0 0
        %407 = vmatprep.subr.bf16.mxu0 0
        %408 = vmatpush2.bf16.msra.mxu0 0
        %409 = vmatprep.subr.bf16.mxu0 0
        %410 = vmatpush2.bf16.msra.mxu0 0
        %411 = vmatprep.subr.bf16.mxu0 0
        %412 = vmatpush2.bf16.msra.mxu0 0
        %413 = vmatprep.mubr.bf16.mxu0 0
        %414 = vmatmul.mubr.bf16.gmra.mxu0 %v317
        %v415 = vpop.f32.mrf.mxu0
        %v416 = vadd.f32 0.0, %v415
        %v417 = vpop.f32.mrf.mxu0
        %v418 = vpop.f32.mrf.mxu0
        %v419 = vadd.f32 0.0, %v418
        %v420 = vpop.f32.mrf.mxu0
        %421 = vmatprep.mubr.bf16.mxu0 0
        %422 = vmatmul.mubr.bf16.gmra.mxu0 %v318
        %v423 = vpop.f32.mrf.mxu0
        %v424 = vadd.f32 0.0, %v423
        %v425 = vpop.f32.mrf.mxu0
        %v426 = vpop.f32.mrf.mxu0
        %v427 = vadd.f32 0.0, %v426
        %v428 = vpop.f32.mrf.mxu0
        %429 = vmatprep.mubr.bf16.mxu0 0
        %430 = vmatmul.mubr.bf16.gmra.mxu0 %v319
        %v431 = vpop.f32.mrf.mxu0
        %v432 = vadd.f32 0.0, %v431
        %v433 = vpop.f32.mrf.mxu0
        %v434 = vpop.f32.mrf.mxu0
        %v435 = vadd.f32 0.0, %v434
        %v436 = vpop.f32.mrf.mxu0
        %437 = vmatprep.mubr.bf16.mxu0 0
        %438 = vmatmul.mubr.bf16.gmra.mxu0 %v320
        %v439 = vpop.f32.mrf.mxu0
        %v440 = vadd.f32 0.0, %v439
        %v441 = vpop.f32.mrf.mxu0
        %v442 = vpop.f32.mrf.mxu0
        %v443 = vadd.f32 0.0, %v442
        %v444 = vpop.f32.mrf.mxu0
        %445 = vmatprep.mubr.bf16.mxu0 0
        %446 = vmatmul.mubr.bf16.gmra.mxu0 %v321
        %v447 = vpop.f32.mrf.mxu0
        %v448 = vadd.f32 0.0, %v447
        %v449 = vpop.f32.mrf.mxu0
        %v450 = vpop.f32.mrf.mxu0
        %v451 = vadd.f32 0.0, %v450
        %v452 = vpop.f32.mrf.mxu0
        %453 = vmatprep.mubr.bf16.mxu0 0
        %454 = vmatmul.mubr.bf16.gmra.mxu0 %v322
        %v455 = vpop.f32.mrf.mxu0
        %v456 = vadd.f32 0.0, %v455
        %v457 = vpop.f32.mrf.mxu0
        %v458 = vpop.f32.mrf.mxu0
        %v459 = vadd.f32 0.0, %v458
        %v460 = vpop.f32.mrf.mxu0
        %461 = vmatprep.mubr.bf16.mxu0 0
        %462 = vmatmul.mubr.bf16.gmra.mxu0 %v323
        %v463 = vpop.f32.mrf.mxu0
        %v464 = vadd.f32 0.0, %v463
        %v465 = vpop.f32.mrf.mxu0
        %v466 = vpop.f32.mrf.mxu0
        %v467 = vadd.f32 0.0, %v466
        %v468 = vpop.f32.mrf.mxu0
        %469 = vmatprep.mubr.bf16.mxu0 0
        %470 = vmatmul.mubr.bf16.gmra.mxu0 %v324
        %v471 = vpop.f32.mrf.mxu0
        %v472 = vadd.f32 0.0, %v471
        %v473 = vpop.f32.mrf.mxu0
        %v474 = vpop.f32.mrf.mxu0
        %v475 = vadd.f32 0.0, %v474
        %v476 = vpop.f32.mrf.mxu0
        %477 = vdwg.mxu0
        %v478 = vadd.f32 %v237, %v416
        %v479 = vadd.f32 %v238, %v419
        %v480 = vadd.f32 %v239, %v424
        %v481 = vadd.f32 %v240, %v427
        %v482 = vadd.f32 %v241, %v432
        %v483 = vadd.f32 %v242, %v435
        %v484 = vadd.f32 %v243, %v440
        %v485 = vadd.f32 %v244, %v443
        %v486 = vadd.f32 %v245, %v448
        %v487 = vadd.f32 %v246, %v451
        %v488 = vadd.f32 %v247, %v456
        %v489 = vadd.f32 %v248, %v459
        %v490 = vadd.f32 %v249, %v464
        %v491 = vadd.f32 %v250, %v467
        %v492 = vadd.f32 %v251, %v472
        %v493 = vadd.f32 %v252, %v475
        %494 = vst [vmem:[#allocation2] sm:$0xff] %v478
        %495 = vst [vmem:[#allocation2 + $0x8] sm:$0xff] %v479
        %496 = vst [vmem:[#allocation2 + $0x10] sm:$0xff] %v480
        %497 = vst [vmem:[#allocation2 + $0x18] sm:$0xff] %v481
        %498 = vst [vmem:[#allocation2 + $0x20] sm:$0xff] %v482
        %499 = vst [vmem:[#allocation2 + $0x28] sm:$0xff] %v483
        %500 = vst [vmem:[#allocation2 + $0x30] sm:$0xff] %v484
        %501 = vst [vmem:[#allocation2 + $0x38] sm:$0xff] %v485
        %502 = vst [vmem:[#allocation2 + $0x40] sm:$0xff] %v486
        %503 = vst [vmem:[#allocation2 + $0x48] sm:$0xff] %v487
        %504 = vst [vmem:[#allocation2 + $0x50] sm:$0xff] %v488
        %505 = vst [vmem:[#allocation2 + $0x58] sm:$0xff] %v489
        %506 = vst [vmem:[#allocation2 + $0x60] sm:$0xff] %v490
        %507 = vst [vmem:[#allocation2 + $0x68] sm:$0xff] %v491
        %508 = vst [vmem:[#allocation2 + $0x70] sm:$0xff] %v492
        %509 = vst [vmem:[#allocation2 + $0x78] sm:$0xff] %v493
        // Predicated region
        $region41: #{tpu_custom_call.1} parent=27 // pred_check
          %p510 = pneg %p217
        $region42: #{tpu_custom_call.1} parent=27 // pred_check_branch
          %512 = sbr.rel (%p510) target = $region44
        $region43: #{tpu_custom_call.1} parent=27 // pred_region
          %v513 = vld [vmem:[#allocation2] sm:$0xff]
          %v514 = vld [vmem:[#allocation2 + $0x8] sm:$0xff]
          %v515 = vld [vmem:[#allocation2 + $0x10] sm:$0xff]
          %v516 = vld [vmem:[#allocation2 + $0x18] sm:$0xff]
          %v517 = vld [vmem:[#allocation2 + $0x20] sm:$0xff]
          %v518 = vld [vmem:[#allocation2 + $0x28] sm:$0xff]
          %v519 = vld [vmem:[#allocation2 + $0x30] sm:$0xff]
          %v520 = vld [vmem:[#allocation2 + $0x38] sm:$0xff]
          %v521 = vld [vmem:[#allocation2 + $0x40] sm:$0xff]
          %v522 = vld [vmem:[#allocation2 + $0x48] sm:$0xff]
          %v523 = vld [vmem:[#allocation2 + $0x50] sm:$0xff]
          %v524 = vld [vmem:[#allocation2 + $0x58] sm:$0xff]
          %v525 = vld [vmem:[#allocation2 + $0x60] sm:$0xff]
          %v526 = vld [vmem:[#allocation2 + $0x68] sm:$0xff]
          %v527 = vld [vmem:[#allocation2 + $0x70] sm:$0xff]
          %v528 = vld [vmem:[#allocation2 + $0x78] sm:$0xff]
          %529 = vst [vmem:[%s212] sm:$0xff] %v513
          %530 = vst [vmem:[%s212 + $0x8] sm:$0xff] %v514
          %531 = vst [vmem:[%s212 + $0x10] sm:$0xff] %v515
          %532 = vst [vmem:[%s212 + $0x18] sm:$0xff] %v516
          %533 = vst [vmem:[%s212 + $0x20] sm:$0xff] %v517
          %534 = vst [vmem:[%s212 + $0x28] sm:$0xff] %v518
          %535 = vst [vmem:[%s212 + $0x30] sm:$0xff] %v519
          %536 = vst [vmem:[%s212 + $0x38] sm:$0xff] %v520
          %537 = vst [vmem:[%s212 + $0x40] sm:$0xff] %v521
          %538 = vst [vmem:[%s212 + $0x48] sm:$0xff] %v522
          %539 = vst [vmem:[%s212 + $0x50] sm:$0xff] %v523
          %540 = vst [vmem:[%s212 + $0x58] sm:$0xff] %v524
          %541 = vst [vmem:[%s212 + $0x60] sm:$0xff] %v525
          %542 = vst [vmem:[%s212 + $0x68] sm:$0xff] %v526
          %543 = vst [vmem:[%s212 + $0x70] sm:$0xff] %v527
          %544 = vst [vmem:[%s212 + $0x78] sm:$0xff] %v528
        $region44: #{tpu_custom_call.1} parent=27 // pred_fallthru
          _
        %s545 = sand.u32 %s105, 1
        %s546 = scalar_lea.sflag [#allocation5], %s545
        %s547 = sand.u32 %s105, 1
        %s548 = smul.addr %s547, 128
        %s549 = scalar_lea.vmem [#allocation8], %s548
        // Predicated region
        $region45: #{tpu_custom_call.1} parent=27 // pred_check
          %p550 = pneg %p115
        $region46: #{tpu_custom_call.1} parent=27 // pred_check_branch
          %552 = sbr.rel (%p550) target = $region48
        $region47: #{tpu_custom_call.1} parent=27 // pred_region
          %s553 = smul.u32 16, %s25
          %s555 = ssub.s32 2048, 2048
          %556 = vsyncadd %s546, %s555
          %s557 = smul.addr %s553, 3
          %s558 = sadd.s32 %s26, %s557
          %s559 = smul.addr %s558, 128
          %s560 = scalar_lea.hbm %s2, %s559
          %s561 = sshll.u32 %s549, 4
          %s562 = int_to_ptr.vmem [resolvable:$true] %s561
          %567 = dma.vmem_to_hbm [thread:$0]  %s562, 2048, %s560, %s546, 128, 384, 8
        $region48: #{tpu_custom_call.1} parent=27 // pred_fallthru
          _
      $region28: #{tpu_custom_call.1} parent=5 // pred_fallthru
        _
      %p568 = scmp.le.s32.totalorder 2, %s15
      // Predicated region
      $region49: #{tpu_custom_call.1} parent=5 // pred_check
        %p569 = pneg %p568
      $region50: #{tpu_custom_call.1} parent=5 // pred_check_branch
        %571 = sbr.rel (%p569) target = $region52
      $region51: #{tpu_custom_call.1} parent=5 // pred_region
        %s572 = ssub.s32 %s15, 2
        // Predicated region
        $region53: #{tpu_custom_call.1} parent=51 // pred_check
          %p573 = pneg %p121
        $region54: #{tpu_custom_call.1} parent=51 // pred_check_branch
          %575 = sbr.rel (%p573) target = $region56
        $region55: #{tpu_custom_call.1} parent=51 // pred_region
          %s576 = sand.u32 %s106, 1
          %s577 = scalar_lea.sflag [#allocation5], %s576
          %s578 = sand.u32 %s106, 1
          %s579 = smul.addr %s578, 128
          %s580 = scalar_lea.vmem [#allocation8], %s579
          %581 = dma.done %s577, 2048
        $region56: #{tpu_custom_call.1} parent=51 // pred_fallthru
          _
      $region52: #{tpu_custom_call.1} parent=5 // pred_fallthru
        _
    $region6: #{tpu_custom_call.1} parent=1 // loop_footer
      %s19 = sadd.s32 1, %s15
    $region7: #{tpu_custom_call.1} parent=1 // loop_footer_branch
      %14 = sbr.rel target = $region3
    $region8: #{tpu_custom_call.1} parent=1 // loop_exit
      _
    %582 = vsyncpa [#allocation4], 1
    %s583 = scalar_lea.sflag [#allocation4], 1
    %584 = vsyncpa %s583, 1
    %585 = vsyncpa [#allocation7], 1
    %s586 = scalar_lea.sflag [#allocation7], 1
    %587 = vsyncpa %s586, 1
    %588 = vsyncpa [#allocation5], 1
    %s589 = scalar_lea.sflag [#allocation5], 1
    %590 = vsyncpa %s589, 1

</llo_original>
